<compile_context>
chip_gen: v5e
topology: v5e:2x2
jax: 0.10.0
libtpu: 0.0.40
codegen_flags: <defaults>
</compile_context>

<pallas_src>
import jax
import jax.numpy as jnp
from jax.experimental import pallas as pl
from jax.experimental.pallas import tpu as pltpu

EPS = 1e-7
_LANES = 128


def _masked_rowsum(t_col_ref, t_row_ref, expr_row_ref):
    """Register-resident (tile_m, 128) partial of sum_j [t_i >= t_j] * exp(r_j - m)."""
    tile_m = t_col_ref.shape[0]
    tile_j = t_row_ref.shape[1]
    # Hoisted, chunk-invariant lane broadcast of the row-tile survival times.
    t_col = jnp.broadcast_to(t_col_ref[...], (tile_m, _LANES))
    acc = jnp.zeros((tile_m, _LANES), jnp.float32)
    # Static (fully unrolled) chunk loop: the (tile_m, tile_j) masked intermediate
    # never materializes; per chunk it is compare + select + add into `acc`.
    for c in range(tile_j // _LANES):
        sl = slice(c * _LANES, (c + 1) * _LANES)
        acc = acc + jnp.where(t_col >= t_row_ref[:, sl], expr_row_ref[:, sl], 0.0)
    return acc


def _finalize(eps_ref, r_col_ref, e_col_ref, acc, out_ref):
    # Single 128-lane XLU reduction per row tile.
    s = jnp.sum(acc, axis=1, keepdims=True)                  # (tile_m, 1)
    log_sum = jnp.log(s + eps_ref[0])                        # eps already shifted by exp(-m)
    # r_col is pre-shifted by -m, so this equals e*(r - log(sum_j exp(r_j) + eps)).
    partial = e_col_ref[...] * (r_col_ref[...] - log_sum)
    num = jnp.sum(partial)                                   # per-row-tile partial numerator
    out_ref[...] = jnp.broadcast_to(num, out_ref.shape).astype(jnp.float32)


def _cox_kernel_single_j(eps_ref, t_col_ref, r_col_ref, e_col_ref,
                         t_row_ref, expr_row_ref, out_ref):
    """g_j == 1: whole risk-set row fits in one step; no scratch accumulator needed."""
    acc = _masked_rowsum(t_col_ref, t_row_ref, expr_row_ref)
    _finalize(eps_ref, r_col_ref, e_col_ref, acc, out_ref)


def _cox_kernel_multi_j(eps_ref, t_col_ref, r_col_ref, e_col_ref,
                        t_row_ref, expr_row_ref, out_ref, acc_ref):
    """g_j >= 2: accumulate narrow (tile_m, 128) partials across j steps in VMEM scratch."""
    j = pl.program_id(1)
    acc = _masked_rowsum(t_col_ref, t_row_ref, expr_row_ref)

    @pl.when(j == 0)
    def _init():
        acc_ref[...] = acc

    @pl.when(j > 0)
    def _accum():
        acc_ref[...] += acc

    @pl.when(j == pl.num_programs(1) - 1)
    def _fin():
        _finalize(eps_ref, r_col_ref, e_col_ref, acc_ref[...], out_ref)


def _round_up(x, m):
    return ((x + m - 1) // m) * m


def cox_loss_pallas(risk_scores, survival_time, event_indicator, *,
                    max_single_step_cols=4096):
    """CoxLoss(vectorized=True).forward via a tiled Pallas TPU kernel."""
    r = jnp.reshape(risk_scores, (-1,)).astype(jnp.float32)
    t = jnp.reshape(survival_time, (-1,)).astype(jnp.float32)
    e = jnp.reshape(event_indicator, (-1,)).astype(jnp.float32)
    n = r.shape[0]

    # ---- padding / tiling selection -------------------------------------------------
    if n <= max_single_step_cols:
        np_ = _round_up(max(n, 256), 256)
        tile_j = np_                                   # single j step (g_j = 1)
    else:
        tile_j = min(2048, _round_up(max_single_step_cols, 256))
        np_ = _round_up(n, tile_j)
    tile_m = 128 if np_ <= 512 else 256                # keep g_i >= 2 for v7x megacore
    g_i = np_ // tile_m
    g_j = np_ // tile_j

    pad = np_ - n
    valid = jnp.pad(jnp.ones((n,), jnp.float32), (0, pad))   # padded cols masked out
    r_p = jnp.pad(r, (0, pad))
    t_p = jnp.pad(t, (0, pad))
    e_p = jnp.pad(e, (0, pad))                                # padded rows: event = 0

    # Numerically stable max-shift (mathematically identical to the reference):
    #   log(sum_j exp(r_j) + eps) = m + log(sum_j exp(r_j - m) + eps*exp(-m))
    m_shift = jnp.maximum(jnp.max(jnp.where(valid > 0, r_p, -jnp.inf)), 0.0)
    r_shift = r_p - m_shift
    exp_row = jnp.exp(r_shift) * valid                        # masked exp, O(N) EUP work, done once
    eps_shift = jnp.maximum(EPS * jnp.exp(-m_shift), 1e-37)   # clamp avoids 0*(-inf) on padded rows
    eps_arr = jnp.reshape(eps_shift, (1,)).astype(jnp.float32)

    t_col = t_p.reshape(np_, 1)
    r_col = r_shift.reshape(np_, 1)
    e_col = e_p.reshape(np_, 1)
    t_row = t_p.reshape(1, np_)
    expr_row = exp_row.reshape(1, np_)

    out_shape = jax.ShapeDtypeStruct((g_i, 1, 128), jnp.float32)
    eps_spec = pl.BlockSpec(memory_space=pltpu.MemorySpace.SMEM)

    if g_j == 1:
        partial_num = pl.pallas_call(
            _cox_kernel_single_j,
            out_shape=out_shape,
            grid=(g_i,),
            in_specs=[
                eps_spec,                                              # eps (shifted), SMEM scalar
                pl.BlockSpec((tile_m, 1), lambda i: (i, 0)),           # t column view
                pl.BlockSpec((tile_m, 1), lambda i: (i, 0)),           # r (shifted) column view
                pl.BlockSpec((tile_m, 1), lambda i: (i, 0)),           # event column view
                pl.BlockSpec((1, tile_j), lambda i: (0, 0)),           # t row view (full)
                pl.BlockSpec((1, tile_j), lambda i: (0, 0)),           # masked exp(r - m) row view (full)
            ],
            out_specs=pl.BlockSpec((1, 1, 128), lambda i: (i, 0, 0)),
            compiler_params=pltpu.CompilerParams(
                dimension_semantics=("parallel",)),
        )(eps_arr, t_col, r_col, e_col, t_row, expr_row)
    else:
        partial_num = pl.pallas_call(
            _cox_kernel_multi_j,
            out_shape=out_shape,
            grid=(g_i, g_j),
            in_specs=[
                eps_spec,
                pl.BlockSpec((tile_m, 1), lambda i, j: (i, 0)),
                pl.BlockSpec((tile_m, 1), lambda i, j: (i, 0)),
                pl.BlockSpec((tile_m, 1), lambda i, j: (i, 0)),
                pl.BlockSpec((1, tile_j), lambda i, j: (0, j)),
                pl.BlockSpec((1, tile_j), lambda i, j: (0, j)),
            ],
            out_specs=pl.BlockSpec((1, 1, 128), lambda i, j: (i, 0, 0)),
            scratch_shapes=[pltpu.VMEM((tile_m, 128), jnp.float32)],   # narrow accumulator
            compiler_params=pltpu.CompilerParams(
                dimension_semantics=("parallel", "arbitrary")),
        )(eps_arr, t_col, r_col, e_col, t_row, expr_row)

    num = jnp.sum(partial_num[:, 0, 0])
    return -num / (jnp.sum(e) + EPS)


def _cox_loss_reference(risk_scores, survival_time, event_indicator, eps=EPS):
    """Pure-JAX port of cox_loss_vectorized (the module's default forward path)."""
    r = jnp.reshape(risk_scores, (-1,)).astype(jnp.float32)
    t = jnp.reshape(survival_time, (-1,)).astype(jnp.float32)
    e = jnp.reshape(event_indicator, (-1,)).astype(jnp.float32)
    risk_set = (t[:, None] >= t[None, :]).astype(jnp.float32)
    log_sum = jnp.log(risk_set @ jnp.exp(r) + eps)
    partial = e * (r - log_sum)
    return -jnp.sum(partial) / (jnp.sum(e) + eps)


# TODO(synk): the non-vectorized branch (vectorized=False) uses a per-sample Python loop with a
# data-dependent `if`; only the module-default vectorized path is implemented.
# TODO(synk): for very large N (>~10K), a sort-by-time + suffix-cumsum O(N log N) formulation in
# the wrapper would beat any tiling of the O(N^2) sweep; not needed at these batch sizes.

if __name__ == "__main__":
    key = jax.random.PRNGKey(0)
    k1, k2, k3 = jax.random.split(key, 3)

    # small case: Np=256, tile_m=128 -> g_i=2 (feeds both v7x TCs), single j step
    N = 8
    risk_scores = jax.random.normal(k1, (N, 1), jnp.float32)            # model outputs (N, 1)
    survival_time = jax.random.uniform(k2, (N,), jnp.float32, 1.0, 10.0)
    event_indicator = (jax.random.uniform(k3, (N,)) > 0.4).astype(jnp.float32)

    loss = jax.block_until_ready(cox_loss_pallas(risk_scores, survival_time, event_indicator))
    ref = _cox_loss_reference(risk_scores, survival_time, event_indicator)
    assert jnp.allclose(loss, ref, rtol=1e-5, atol=1e-5), (loss, ref)

    # larger case exercising multiple i tiles with a single j step (Np=768 -> grid (3,))
    k4, k5, k6 = jax.random.split(jax.random.PRNGKey(1), 3)
    N2 = 700
    r2 = jax.random.normal(k4, (N2, 1), jnp.float32)
    t2 = jax.random.uniform(k5, (N2,), jnp.float32, 1.0, 10.0)
    e2 = (jax.random.uniform(k6, (N2,)) > 0.4).astype(jnp.float32)
    loss2 = jax.block_until_ready(cox_loss_pallas(r2, t2, e2))
    ref2 = _cox_loss_reference(r2, t2, e2)
    assert jnp.allclose(loss2, ref2, rtol=1e-4, atol=1e-4), (loss2, ref2)

    # force the multi-j (accumulating) kernel path at small shapes: Np=768 -> grid (3, 3)
    loss3 = jax.block_until_ready(cox_loss_pallas(r2, t2, e2, max_single_step_cols=256))
    assert jnp.allclose(loss3, ref2, rtol=1e-4, atol=1e-4), (loss3, ref2)

    print("KERNEL_OK")
</pallas_src>

<mosaic_0001>
module attributes {stable_mosaic.version = 11 : i64} {
  func.func @_cox_kernel_single_j(%arg0: i32, %arg1: memref<1xf32, #tpu.memory_space<smem>>, %arg2: memref<128x1xf32, #tpu.memory_space<vmem>>, %arg3: memref<128x1xf32, #tpu.memory_space<vmem>>, %arg4: memref<128x1xf32, #tpu.memory_space<vmem>>, %arg5: memref<1x256xf32, #tpu.memory_space<vmem>>, %arg6: memref<1x256xf32, #tpu.memory_space<vmem>>, %arg7: memref<1x1x128xf32, #tpu.memory_space<vmem>>) attributes {dimension_semantics = [#tpu.dimension_semantics<parallel>], iteration_bounds = array<i64: 2>, scalar_prefetch = 0 : i64, scratch_operands = 0 : i64, tpu.core_type = #tpu.core_type<tc>, window_params = [{transform_indices = @transform_0, window_bounds = array<i64: 1>}, {transform_indices = @transform_1, window_bounds = array<i64: 128, 1>}, {transform_indices = @transform_2, window_bounds = array<i64: 128, 1>}, {transform_indices = @transform_3, window_bounds = array<i64: 128, 1>}, {pipeline_mode = #tpu.pipeline_mode<synchronous>, transform_indices = @transform_4, window_bounds = array<i64: 1, 256>}, {pipeline_mode = #tpu.pipeline_mode<synchronous>, transform_indices = @transform_5, window_bounds = array<i64: 1, 256>}, {transform_indices = @transform_6, window_bounds = array<i64: 1, 1, 128>}]} {
    %c0 = arith.constant 0 : index
    %c0_0 = arith.constant 0 : index
    %0 = vector.load %arg2[%c0, %c0_0] : memref<128x1xf32, #tpu.memory_space<vmem>>, vector<128x1xf32>
    %1 = vector.shape_cast %0 : vector<128x1xf32> to vector<128x1xf32>
    %2 = vector.broadcast %1 : vector<128x1xf32> to vector<128x128xf32>
    %cst = arith.constant 0.000000e+00 : f32
    %3 = vector.broadcast %cst : f32 to vector<128x128xf32>
    %c0_1 = arith.constant 0 : index
    %c0_2 = arith.constant 0 : index
    %4 = vector.load %arg5[%c0_1, %c0_2] : memref<1x256xf32, #tpu.memory_space<vmem>>, vector<1x128xf32>
    %5 = vector.broadcast %4 : vector<1x128xf32> to vector<128x128xf32>
    %6 = arith.cmpf oge, %2, %5 : vector<128x128xf32>
    %c0_3 = arith.constant 0 : index
    %c0_4 = arith.constant 0 : index
    %7 = vector.load %arg6[%c0_3, %c0_4] : memref<1x256xf32, #tpu.memory_space<vmem>>, vector<1x128xf32>
    %cst_5 = arith.constant 0.000000e+00 : f32
    %8 = vector.shape_cast %7 : vector<1x128xf32> to vector<1x128xf32>
    %9 = vector.broadcast %8 : vector<1x128xf32> to vector<128x128xf32>
    %10 = vector.broadcast %cst_5 : f32 to vector<128x128xf32>
    %11 = arith.select %6, %9, %10 : vector<128x128xi1>, vector<128x128xf32>
    %12 = arith.addf %3, %11 : vector<128x128xf32>
    %c0_6 = arith.constant 0 : index
    %c128 = arith.constant 128 : index
    %13 = vector.load %arg5[%c0_6, %c128] : memref<1x256xf32, #tpu.memory_space<vmem>>, vector<1x128xf32>
    %14 = vector.broadcast %13 : vector<1x128xf32> to vector<128x128xf32>
    %15 = arith.cmpf oge, %2, %14 : vector<128x128xf32>
    %c0_7 = arith.constant 0 : index
    %c128_8 = arith.constant 128 : index
    %16 = vector.load %arg6[%c0_7, %c128_8] : memref<1x256xf32, #tpu.memory_space<vmem>>, vector<1x128xf32>
    %cst_9 = arith.constant 0.000000e+00 : f32
    %17 = vector.shape_cast %16 : vector<1x128xf32> to vector<1x128xf32>
    %18 = vector.broadcast %17 : vector<1x128xf32> to vector<128x128xf32>
    %19 = vector.broadcast %cst_9 : f32 to vector<128x128xf32>
    %20 = arith.select %15, %18, %19 : vector<128x128xi1>, vector<128x128xf32>
    %21 = arith.addf %12, %20 : vector<128x128xf32>
    %cst_10 = arith.constant dense<0.000000e+00> : vector<128xf32>
    %22 = vector.multi_reduction <add>, %21, %cst_10 [1] : vector<128x128xf32> to vector<128xf32>
    %23 = vector.shape_cast %22 : vector<128xf32> to vector<128x1xf32>
    %c0_11 = arith.constant 0 : index
    %24 = memref.load %arg1[%c0_11] : memref<1xf32, #tpu.memory_space<smem>>
    %25 = vector.broadcast %24 : f32 to vector<128x1xf32>
    %26 = arith.addf %23, %25 : vector<128x1xf32>
    %27 = math.log %26 : vector<128x1xf32>
    %c0_12 = arith.constant 0 : index
    %c0_13 = arith.constant 0 : index
    %28 = vector.load %arg4[%c0_12, %c0_13] : memref<128x1xf32, #tpu.memory_space<vmem>>, vector<128x1xf32>
    %c0_14 = arith.constant 0 : index
    %c0_15 = arith.constant 0 : index
    %29 = vector.load %arg3[%c0_14, %c0_15] : memref<128x1xf32, #tpu.memory_space<vmem>>, vector<128x1xf32>
    %30 = arith.subf %29, %27 : vector<128x1xf32>
    %31 = arith.mulf %28, %30 : vector<128x1xf32>
    %32 = vector.shape_cast %31 : vector<128x1xf32> to vector<1x128x1xf32>
    %cst_16 = arith.constant dense<0.000000e+00> : vector<1xf32>
    %33 = vector.multi_reduction <add>, %32, %cst_16 [1, 2] : vector<1x128x1xf32> to vector<1xf32>
    %34 = vector.shape_cast %33 : vector<1xf32> to vector<1x1x1xf32>
    %35 = vector.extract %34[0, 0, 0] : f32 from vector<1x1x1xf32>
    %36 = vector.broadcast %35 : f32 to vector<1x1x128xf32>
    %c0_17 = arith.constant 0 : index
    %c0_18 = arith.constant 0 : index
    %c0_19 = arith.constant 0 : index
    %37 = vector.load %arg7[%c0_17, %c0_18, %c0_19] : memref<1x1x128xf32, #tpu.memory_space<vmem>>, vector<1x1x128xf32>
    tpu.vector_store %arg7[%c0_17, %c0_18, %c0_19], %36 {strides = array<i32>} : memref<1x1x128xf32, #tpu.memory_space<vmem>>, vector<1x1x128xf32>,
    return
  }
  func.func @transform_0(%arg0: i32) -> i32 {
    %c0_i32 = arith.constant 0 : i32
    %c0_i32_0 = arith.constant 0 : i32
    return %c0_i32 : i32
  }
  func.func @transform_1(%arg0: i32) -> (i32, i32) {
    %c0_i32 = arith.constant 0 : i32
    %c0_i32_0 = arith.constant 0 : i32
    return %arg0, %c0_i32 : i32, i32
  }
  func.func @transform_2(%arg0: i32) -> (i32, i32) {
    %c0_i32 = arith.constant 0 : i32
    %c0_i32_0 = arith.constant 0 : i32
    return %arg0, %c0_i32 : i32, i32
  }
  func.func @transform_3(%arg0: i32) -> (i32, i32) {
    %c0_i32 = arith.constant 0 : i32
    %c0_i32_0 = arith.constant 0 : i32
    return %arg0, %c0_i32 : i32, i32
  }
  func.func @transform_4(%arg0: i32) -> (i32, i32) {
    %c0_i32 = arith.constant 0 : i32
    %c0_i32_0 = arith.constant 0 : i32
    %c0_i32_1 = arith.constant 0 : i32
    return %c0_i32, %c0_i32_0 : i32, i32
  }
  func.func @transform_5(%arg0: i32) -> (i32, i32) {
    %c0_i32 = arith.constant 0 : i32
    %c0_i32_0 = arith.constant 0 : i32
    %c0_i32_1 = arith.constant 0 : i32
    return %c0_i32, %c0_i32_0 : i32, i32
  }
  func.func @transform_6(%arg0: i32) -> (i32, i32, i32) {
    %c0_i32 = arith.constant 0 : i32
    %c0_i32_0 = arith.constant 0 : i32
    %c0_i32_1 = arith.constant 0 : i32
    return %arg0, %c0_i32, %c0_i32_0 : i32, i32, i32
  }
}

</mosaic_0001>

<llo_original>
// kernel: tpu_custom_call.1
$region0: #{tpu_custom_call.1}
  #allocation0 [shape = 'u32[]', space=smem, size = 0x4, offset = 0x4, fixed_abs, tag = 'smem constant byte address 0x4 - core index']
  #allocation1 [shape = 'u32[72,128]{1,0:T(1,128)}', space=vmem, size = 0x9000, scoped, tag = 'internal scratch']
  #allocation2 [shape = 'f32[1]{0:T(128)S(6)}', space=smem, size = 0x200, scoped, tag = 'scoped memory for tpu_custom_call.1']
  %s0 = inlined_call_operand.<no memory space> [shape: f32[1], index: 0, kind: input, shape index: {}]
  %s1 = inlined_call_operand.vmem [shape: f32[256,1], index: 1, kind: input, shape index: {}]
  %s2 = inlined_call_operand.vmem [shape: f32[256,1], index: 2, kind: input, shape index: {}]
  %s3 = inlined_call_operand.vmem [shape: f32[256,1], index: 3, kind: input, shape index: {}]
  %s4 = inlined_call_operand.vmem [shape: f32[1,256], index: 4, kind: input, shape index: {}]
  %s5 = inlined_call_operand.vmem [shape: f32[1,256], index: 5, kind: input, shape index: {}]
  %s6 = inlined_call_operand.hbm [shape: f32[2,1,128], index: 6, kind: output, shape index: {}]
  %s7 = sld [smem:[#allocation0]]
  $region57: #{tpu_custom_call.1} parent=0
    _
  %s9 = ssub.s32 1, %s7
  %s10 = scalar_select 0, %s9, %s7
  %11 = sst [smem:[#allocation2]] %s0
  $region1: #{tpu_custom_call.1} parent=0
    #allocation3 [shape = 'u8[1024]{0}', space=vmem, size = 0x400, scoped, tag = 'output window, operand 0']
    #allocation4 [shape = 's32[2]{0}', space=sflag, size = 0x8, scoped, tag = 'scoped memory for tpu_custom_call.1']
    %12 = vsyncpa [#allocation4], 0
    %s13 = scalar_lea.sflag [#allocation4], 1
    %14 = vsyncpa %s13, 0
    loop: start=0, step=1, limit=4
    $region2: #{tpu_custom_call.1} parent=1 // loop_pre_header
      _
    $region3: #{tpu_custom_call.1} parent=1 // loop_header
      %s16 = sphi 0, %s20
      %p17 = scmp.ge.s32.totalorder %s16, 4
      %s24 = sphi 0, %s24
      %s26 = sphi 0, %s24
      %s27 = sphi 0, %s26
      %s41 = sphi 0, %s27
      %s47 = sphi 0, %s49
      %s50 = sphi 0, %s47
      %s51 = sphi 0, %s50
      %s67 = sphi 0, %s51
      %s73 = sphi 0, %s75
      %s76 = sphi 0, %s73
      %s77 = sphi 0, %s76
      %s93 = sphi 0, %s77
      %s99 = sphi 0, %s101
      %s102 = sphi 0, %s99
      %s103 = sphi 0, %s102
      %s119 = sphi 0, %s103
      %s123 = sphi 0, %s123
      %s125 = sphi 0, %s123
      %s126 = sphi 0, %s125
      %s140 = sphi 0, %s126
      %s144 = sphi 0, %s144
      %s146 = sphi 0, %s144
      %s147 = sphi 0, %s146
      %s161 = sphi 0, %s147
      %s167 = sphi 0, %s169
      %s170 = sphi 0, %s167
      %s171 = sphi 0, %s170
      %s187 = sphi 0, %s171
    $region4: #{tpu_custom_call.1} parent=1 // loop_header_branch
      %19 = sbr.rel (%p17) target = $region8
    $region5: #{tpu_custom_call.1} parent=1 // loop_body
      %s21 = ssub.s32 %s16, 1
      %s22 = ssub.s32 %s16, 2
      %s23 = sadd.s32 %s16, 1
      %s25 = sadd.s32 %s24, 1
      %p28 = scmp.eq.s32.totalorder %s16, 1
      %p29 = scmp.ne.s32.totalorder %s24, %s26
      %p30 = scmp.eq.s32.totalorder %s16, 0
      %p31 = por %p29, %p30
      %p32 = scmp.ne.s32.totalorder %s24, %s26
      %p33 = scmp.eq.s32.totalorder %s21, 1
      %p34 = por %p32, %p33
      %p35 = scmp.ne.s32.totalorder %s26, %s27
      %p36 = scmp.eq.s32.totalorder %s21, 0
      %p37 = por %p35, %p36
      %p38 = scmp.ne.s32.totalorder %s26, %s27
      %p39 = scmp.eq.s32.totalorder %s22, 1
      %p40 = por %p38, %p39
      %p42 = scmp.ne.s32.totalorder %s27, %s41
      %p43 = scmp.eq.s32.totalorder %s22, 0
      %p44 = por %p42, %p43
      %s45 = ssub.s32 %s16, %s23
      %p46 = scmp.eq.s32.totalorder %s45, 0
      %s48 = sadd.s32 %s47, 1
      %s49 = scalar_select %p46, %s47, %s48
      %p52 = pneg %p46
      %p53 = scmp.eq.s32.totalorder %s16, 1
      %p54 = por %p52, %p53
      %p55 = scmp.ne.s32.totalorder %s47, %s50
      %p56 = scmp.eq.s32.totalorder %s16, 0
      %p57 = por %p55, %p56
      %p58 = scmp.ne.s32.totalorder %s47, %s50
      %p59 = scmp.eq.s32.totalorder %s21, 1
      %p60 = por %p58, %p59
      %p61 = scmp.ne.s32.totalorder %s50, %s51
      %p62 = scmp.eq.s32.totalorder %s21, 0
      %p63 = por %p61, %p62
      %p64 = scmp.ne.s32.totalorder %s50, %s51
      %p65 = scmp.eq.s32.totalorder %s22, 1
      %p66 = por %p64, %p65
      %p68 = scmp.ne.s32.totalorder %s51, %s67
      %p69 = scmp.eq.s32.totalorder %s22, 0
      %p70 = por %p68, %p69
      %s71 = ssub.s32 %s16, %s23
      %p72 = scmp.eq.s32.totalorder %s71, 0
      %s74 = sadd.s32 %s73, 1
      %s75 = scalar_select %p72, %s73, %s74
      %p78 = pneg %p72
      %p79 = scmp.eq.s32.totalorder %s16, 1
      %p80 = por %p78, %p79
      %p81 = scmp.ne.s32.totalorder %s73, %s76
      %p82 = scmp.eq.s32.totalorder %s16, 0
      %p83 = por %p81, %p82
      %p84 = scmp.ne.s32.totalorder %s73, %s76
      %p85 = scmp.eq.s32.totalorder %s21, 1
      %p86 = por %p84, %p85
      %p87 = scmp.ne.s32.totalorder %s76, %s77
      %p88 = scmp.eq.s32.totalorder %s21, 0
      %p89 = por %p87, %p88
      %p90 = scmp.ne.s32.totalorder %s76, %s77
      %p91 = scmp.eq.s32.totalorder %s22, 1
      %p92 = por %p90, %p91
      %p94 = scmp.ne.s32.totalorder %s77, %s93
      %p95 = scmp.eq.s32.totalorder %s22, 0
      %p96 = por %p94, %p95
      %s97 = ssub.s32 %s16, %s23
      %p98 = scmp.eq.s32.totalorder %s97, 0
      %s100 = sadd.s32 %s99, 1
      %s101 = scalar_select %p98, %s99, %s100
      %p104 = pneg %p98
      %p105 = scmp.eq.s32.totalorder %s16, 1
      %p106 = por %p104, %p105
      %p107 = scmp.ne.s32.totalorder %s99, %s102
      %p108 = scmp.eq.s32.totalorder %s16, 0
      %p109 = por %p107, %p108
      %p110 = scmp.ne.s32.totalorder %s99, %s102
      %p111 = scmp.eq.s32.totalorder %s21, 1
      %p112 = por %p110, %p111
      %p113 = scmp.ne.s32.totalorder %s102, %s103
      %p114 = scmp.eq.s32.totalorder %s21, 0
      %p115 = por %p113, %p114
      %p116 = scmp.ne.s32.totalorder %s102, %s103
      %p117 = scmp.eq.s32.totalorder %s22, 1
      %p118 = por %p116, %p117
      %p120 = scmp.ne.s32.totalorder %s103, %s119
      %p121 = scmp.eq.s32.totalorder %s22, 0
      %p122 = por %p120, %p121
      %s124 = sadd.s32 %s123, 1
      %p127 = scmp.eq.s32.totalorder %s16, 1
      %p128 = scmp.ne.s32.totalorder %s123, %s125
      %p129 = scmp.eq.s32.totalorder %s16, 0
      %p130 = por %p128, %p129
      %p131 = scmp.ne.s32.totalorder %s123, %s125
      %p132 = scmp.eq.s32.totalorder %s21, 1
      %p133 = por %p131, %p132
      %p134 = scmp.ne.s32.totalorder %s125, %s126
      %p135 = scmp.eq.s32.totalorder %s21, 0
      %p136 = por %p134, %p135
      %p137 = scmp.ne.s32.totalorder %s125, %s126
      %p138 = scmp.eq.s32.totalorder %s22, 1
      %p139 = por %p137, %p138
      %p141 = scmp.ne.s32.totalorder %s126, %s140
      %p142 = scmp.eq.s32.totalorder %s22, 0
      %p143 = por %p141, %p142
      %s145 = sadd.s32 %s144, 1
      %p148 = scmp.eq.s32.totalorder %s16, 1
      %p149 = scmp.ne.s32.totalorder %s144, %s146
      %p150 = scmp.eq.s32.totalorder %s16, 0
      %p151 = por %p149, %p150
      %p152 = scmp.ne.s32.totalorder %s144, %s146
      %p153 = scmp.eq.s32.totalorder %s21, 1
      %p154 = por %p152, %p153
      %p155 = scmp.ne.s32.totalorder %s146, %s147
      %p156 = scmp.eq.s32.totalorder %s21, 0
      %p157 = por %p155, %p156
      %p158 = scmp.ne.s32.totalorder %s146, %s147
      %p159 = scmp.eq.s32.totalorder %s22, 1
      %p160 = por %p158, %p159
      %p162 = scmp.ne.s32.totalorder %s147, %s161
      %p163 = scmp.eq.s32.totalorder %s22, 0
      %p164 = por %p162, %p163
      %s165 = ssub.s32 %s16, %s23
      %p166 = scmp.eq.s32.totalorder %s165, 0
      %s168 = sadd.s32 %s167, 1
      %s169 = scalar_select %p166, %s167, %s168
      %p172 = pneg %p166
      %p173 = scmp.eq.s32.totalorder %s16, 1
      %p174 = por %p172, %p173
      %p175 = scmp.ne.s32.totalorder %s167, %s170
      %p176 = scmp.eq.s32.totalorder %s16, 0
      %p177 = por %p175, %p176
      %p178 = scmp.ne.s32.totalorder %s167, %s170
      %p179 = scmp.eq.s32.totalorder %s21, 1
      %p180 = por %p178, %p179
      %p181 = scmp.ne.s32.totalorder %s170, %s171
      %p182 = scmp.eq.s32.totalorder %s21, 0
      %p183 = por %p181, %p182
      %p184 = scmp.ne.s32.totalorder %s170, %s171
      %p185 = scmp.eq.s32.totalorder %s22, 1
      %p186 = por %p184, %p185
      %p188 = scmp.ne.s32.totalorder %s171, %s187
      %p189 = scmp.eq.s32.totalorder %s22, 0
      %p190 = por %p188, %p189
      %p191 = scmp.le.s32.totalorder 1, %s16
      %p192 = scmp.lt.s32.totalorder %s16, 3
      %p193 = pnand %p191, %p192
      %p194 = pneg %p193
      // Predicated region
      $region9: #{tpu_custom_call.1} parent=5 // pred_check
        _
      $region10: #{tpu_custom_call.1} parent=5 // pred_check_branch
        %196 = sbr.rel (%p193) target = $region12
      $region11: #{tpu_custom_call.1} parent=5 // pred_region
        %s197 = ssub.s32 %s16, 1
        // Predicated region
        $region13: #{tpu_custom_call.1} parent=11 // pred_check
          %p198 = pneg %p37
        $region14: #{tpu_custom_call.1} parent=11 // pred_check_branch
          %200 = sbr.rel (%p198) target = $region16
        $region15: #{tpu_custom_call.1} parent=11 // pred_region
          _
        $region16: #{tpu_custom_call.1} parent=11 // pred_fallthru
          _
        // Predicated region
        $region17: #{tpu_custom_call.1} parent=11 // pred_check
          %p201 = pneg %p136
        $region18: #{tpu_custom_call.1} parent=11 // pred_check_branch
          %203 = sbr.rel (%p201) target = $region20
        $region19: #{tpu_custom_call.1} parent=11 // pred_region
          _
        $region20: #{tpu_custom_call.1} parent=11 // pred_fallthru
          _
        // Predicated region
        $region21: #{tpu_custom_call.1} parent=11 // pred_check
          %p204 = pneg %p157
        $region22: #{tpu_custom_call.1} parent=11 // pred_check_branch
          %206 = sbr.rel (%p204) target = $region24
        $region23: #{tpu_custom_call.1} parent=11 // pred_region
          _
        $region24: #{tpu_custom_call.1} parent=11 // pred_fallthru
          _
      $region12: #{tpu_custom_call.1} parent=5 // pred_fallthru
        _
      %p207 = scmp.lt.s32.totalorder %s16, 2
      // Predicated region
      $region25: #{tpu_custom_call.1} parent=5 // pred_check
        %p208 = pneg %p207
      $region26: #{tpu_custom_call.1} parent=5 // pred_check_branch
        %210 = sbr.rel (%p208) target = $region28
      $region27: #{tpu_custom_call.1} parent=5 // pred_region
        // Predicated region
        $region29: #{tpu_custom_call.1} parent=27 // pred_check
          %p211 = pneg %p57
        $region30: #{tpu_custom_call.1} parent=27 // pred_check_branch
          %213 = sbr.rel (%p211) target = $region32
        $region31: #{tpu_custom_call.1} parent=27 // pred_region
          %s214 = smul.u32 16, %s16
          %p215 = scmp.lt.s32.totalorder %s214, 31
          %s216 = scalar_select %p215, %s214, 31
          %s217 = smul.addr %s216, 8
          %s218 = scalar_lea.vmem %s1, %s217
          %s219 = smul.u32 16, %s16
        $region32: #{tpu_custom_call.1} parent=27 // pred_fallthru
          _
        // Predicated region
        $region33: #{tpu_custom_call.1} parent=27 // pred_check
          %p220 = pneg %p83
        $region34: #{tpu_custom_call.1} parent=27 // pred_check_branch
          %222 = sbr.rel (%p220) target = $region36
        $region35: #{tpu_custom_call.1} parent=27 // pred_region
          %s223 = smul.u32 16, %s16
          %p224 = scmp.lt.s32.totalorder %s223, 31
          %s225 = scalar_select %p224, %s223, 31
          %s226 = smul.addr %s225, 8
          %s227 = scalar_lea.vmem %s2, %s226
          %s228 = smul.u32 16, %s16
        $region36: #{tpu_custom_call.1} parent=27 // pred_fallthru
          _
        // Predicated region
        $region37: #{tpu_custom_call.1} parent=27 // pred_check
          %p229 = pneg %p109
        $region38: #{tpu_custom_call.1} parent=27 // pred_check_branch
          %231 = sbr.rel (%p229) target = $region40
        $region39: #{tpu_custom_call.1} parent=27 // pred_region
          %s232 = smul.u32 16, %s16
          %p233 = scmp.lt.s32.totalorder %s232, 31
          %s234 = scalar_select %p233, %s232, 31
          %s235 = smul.addr %s234, 8
          %s236 = scalar_lea.vmem %s3, %s235
          %s237 = smul.u32 16, %s16
        $region40: #{tpu_custom_call.1} parent=27 // pred_fallthru
          _
      $region28: #{tpu_custom_call.1} parent=5 // pred_fallthru
        _
      %p238 = scmp.le.s32.totalorder 1, %s16
      %p239 = scmp.lt.s32.totalorder %s16, 3
      %p240 = pnand %p238, %p239
      %p241 = pneg %p240
      // Predicated region
      $region41: #{tpu_custom_call.1} parent=5 // pred_check
        _
      $region42: #{tpu_custom_call.1} parent=5 // pred_check_branch
        %243 = sbr.rel (%p240) target = $region44
      $region43: #{tpu_custom_call.1} parent=5 // pred_region
        %s244 = ssub.s32 %s16, 1
        %p245 = pneg %p37
        %p246 = pneg %p34
        %s247 = smul.u32 16, %s21
        %p248 = scmp.lt.s32.totalorder %s247, 31
        %s249 = scalar_select %p248, %s247, 31
        %s250 = smul.addr %s249, 8
        %s251 = scalar_lea.vmem %s1, %s250
        %p252 = pneg %p63
        %p253 = pneg %p60
        %s254 = smul.u32 16, %s21
        %p255 = scmp.lt.s32.totalorder %s254, 31
        %s256 = scalar_select %p255, %s254, 31
        %s257 = smul.addr %s256, 8
        %s258 = scalar_lea.vmem %s2, %s257
        %p259 = pneg %p89
        %p260 = pneg %p86
        %s261 = smul.u32 16, %s21
        %p262 = scmp.lt.s32.totalorder %s261, 31
        %s263 = scalar_select %p262, %s261, 31
        %s264 = smul.addr %s263, 8
        %s265 = scalar_lea.vmem %s3, %s264
        %p266 = pneg %p115
        %p267 = pneg %p112
        %p268 = pneg %p136
        %p269 = pneg %p133
        %p270 = pneg %p157
        %p271 = pneg %p154
        %p272 = pneg %p183
        %p273 = pneg %p180
        %s274 = sand.u32 %s170, 1
        %s275 = scalar_lea.sflag [#allocation4], %s274
        %s276 = sand.u32 %s170, 1
        %s277 = scalar_lea.vmem [#allocation3], %s276
        %s278 = smul.u32 16, %s21
        %p279 = scmp.lt.s32.totalorder %s278, 31
        %s280 = scalar_select %p279, %s278, 31
        %s281 = smul.addr %s280, 8
        %s282 = scalar_lea.vmem %s1, %s281
        %s283 = smul.u32 16, %s21
        %s284 = smul.u32 16, %s21
        %p285 = scmp.lt.s32.totalorder %s284, 31
        %s286 = scalar_select %p285, %s284, 31
        %s287 = smul.addr %s286, 8
        %s288 = scalar_lea.vmem %s2, %s287
        %s289 = smul.u32 16, %s21
        %s290 = smul.u32 16, %s21
        %p291 = scmp.lt.s32.totalorder %s290, 31
        %s292 = scalar_select %p291, %s290, 31
        %s293 = smul.addr %s292, 8
        %s294 = scalar_lea.vmem %s3, %s293
        %s295 = smul.u32 16, %s21
        %v296 = vld [vmem:[%s282] sm:$0xff]
        %v297 = vld [vmem:[%s282 + $0x8] sm:$0xff]
        %v298 = vld [vmem:[%s282 + $0x10] sm:$0xff]
        %v299 = vld [vmem:[%s282 + $0x18] sm:$0xff]
        %v300 = vld [vmem:[%s282 + $0x20] sm:$0xff]
        %v301 = vld [vmem:[%s282 + $0x28] sm:$0xff]
        %v302 = vld [vmem:[%s282 + $0x30] sm:$0xff]
        %v303 = vld [vmem:[%s282 + $0x38] sm:$0xff]
        %v304 = vld [vmem:[%s282 + $0x40] sm:$0xff]
        %v305 = vld [vmem:[%s282 + $0x48] sm:$0xff]
        %v306 = vld [vmem:[%s282 + $0x50] sm:$0xff]
        %v307 = vld [vmem:[%s282 + $0x58] sm:$0xff]
        %v308 = vld [vmem:[%s282 + $0x60] sm:$0xff]
        %v309 = vld [vmem:[%s282 + $0x68] sm:$0xff]
        %v310 = vld [vmem:[%s282 + $0x70] sm:$0xff]
        %v311 = vld [vmem:[%s282 + $0x78] sm:$0xff]
        %313 = vset.pattern.permute.xlu0 0
        %314 = vperm.xlu0 %313, %v296
        %v315 = vpop.permute.xlu0 %314
        %318 = vset.pattern.permute.xlu0 0
        %319 = vperm.xlu0 %318, %v297
        %v320 = vpop.permute.xlu0 %319
        %323 = vset.pattern.permute.xlu0 0
        %324 = vperm.xlu0 %323, %v298
        %v325 = vpop.permute.xlu0 %324
        %328 = vset.pattern.permute.xlu0 0
        %329 = vperm.xlu0 %328, %v299
        %v330 = vpop.permute.xlu0 %329
        %333 = vset.pattern.permute.xlu0 0
        %334 = vperm.xlu0 %333, %v300
        %v335 = vpop.permute.xlu0 %334
        %338 = vset.pattern.permute.xlu0 0
        %339 = vperm.xlu0 %338, %v301
        %v340 = vpop.permute.xlu0 %339
        %343 = vset.pattern.permute.xlu0 0
        %344 = vperm.xlu0 %343, %v302
        %v345 = vpop.permute.xlu0 %344
        %348 = vset.pattern.permute.xlu0 0
        %349 = vperm.xlu0 %348, %v303
        %v350 = vpop.permute.xlu0 %349
        %353 = vset.pattern.permute.xlu0 0
        %354 = vperm.xlu0 %353, %v304
        %v355 = vpop.permute.xlu0 %354
        %358 = vset.pattern.permute.xlu0 0
        %359 = vperm.xlu0 %358, %v305
        %v360 = vpop.permute.xlu0 %359
        %363 = vset.pattern.permute.xlu0 0
        %364 = vperm.xlu0 %363, %v306
        %v365 = vpop.permute.xlu0 %364
        %368 = vset.pattern.permute.xlu0 0
        %369 = vperm.xlu0 %368, %v307
        %v370 = vpop.permute.xlu0 %369
        %373 = vset.pattern.permute.xlu0 0
        %374 = vperm.xlu0 %373, %v308
        %v375 = vpop.permute.xlu0 %374
        %378 = vset.pattern.permute.xlu0 0
        %379 = vperm.xlu0 %378, %v309
        %v380 = vpop.permute.xlu0 %379
        %383 = vset.pattern.permute.xlu0 0
        %384 = vperm.xlu0 %383, %v310
        %v385 = vpop.permute.xlu0 %384
        %388 = vset.pattern.permute.xlu0 0
        %389 = vperm.xlu0 %388, %v311
        %v390 = vpop.permute.xlu0 %389
        %v392 = vld [vmem:[%s4] sm:$0x1]
        %v394 = vperm.slane %v392, 0
        %vm396 = vcmp.ge.f32.partialorder %v315, %v394
        %vm397 = vcmp.ge.f32.partialorder %v320, %v394
        %vm398 = vcmp.ge.f32.partialorder %v325, %v394
        %vm399 = vcmp.ge.f32.partialorder %v330, %v394
        %vm400 = vcmp.ge.f32.partialorder %v335, %v394
        %vm401 = vcmp.ge.f32.partialorder %v340, %v394
        %vm402 = vcmp.ge.f32.partialorder %v345, %v394
        %vm403 = vcmp.ge.f32.partialorder %v350, %v394
        %vm404 = vcmp.ge.f32.partialorder %v355, %v394
        %vm405 = vcmp.ge.f32.partialorder %v360, %v394
        %vm406 = vcmp.ge.f32.partialorder %v365, %v394
        %vm407 = vcmp.ge.f32.partialorder %v370, %v394
        %vm408 = vcmp.ge.f32.partialorder %v375, %v394
        %vm409 = vcmp.ge.f32.partialorder %v380, %v394
        %vm410 = vcmp.ge.f32.partialorder %v385, %v394
        %vm411 = vcmp.ge.f32.partialorder %v390, %v394
        %v412 = vld [vmem:[%s5] sm:$0x1]
        %v414 = vperm.slane %v412, 0
        %v416 = vsel %vm396, %v414, 0.0
        %v417 = vsel %vm397, %v414, 0.0
        %v418 = vsel %vm398, %v414, 0.0
        %v419 = vsel %vm399, %v414, 0.0
        %v420 = vsel %vm400, %v414, 0.0
        %v421 = vsel %vm401, %v414, 0.0
        %v422 = vsel %vm402, %v414, 0.0
        %v423 = vsel %vm403, %v414, 0.0
        %v424 = vsel %vm404, %v414, 0.0
        %v425 = vsel %vm405, %v414, 0.0
        %v426 = vsel %vm406, %v414, 0.0
        %v427 = vsel %vm407, %v414, 0.0
        %v428 = vsel %vm408, %v414, 0.0
        %v429 = vsel %vm409, %v414, 0.0
        %v430 = vsel %vm410, %v414, 0.0
        %v431 = vsel %vm411, %v414, 0.0
        %v432 = vadd.f32 %v416, 0.0
        %v433 = vadd.f32 %v417, 0.0
        %v434 = vadd.f32 %v418, 0.0
        %v435 = vadd.f32 %v419, 0.0
        %v436 = vadd.f32 %v420, 0.0
        %v437 = vadd.f32 %v421, 0.0
        %v438 = vadd.f32 %v422, 0.0
        %v439 = vadd.f32 %v423, 0.0
        %v440 = vadd.f32 %v424, 0.0
        %v441 = vadd.f32 %v425, 0.0
        %v442 = vadd.f32 %v426, 0.0
        %v443 = vadd.f32 %v427, 0.0
        %v444 = vadd.f32 %v428, 0.0
        %v445 = vadd.f32 %v429, 0.0
        %v446 = vadd.f32 %v430, 0.0
        %v447 = vadd.f32 %v431, 0.0
        %v448 = vld [vmem:[%s4 + $0x1] sm:$0x1]
        %v450 = vperm.slane %v448, 0
        %vm452 = vcmp.ge.f32.partialorder %v315, %v450
        %vm453 = vcmp.ge.f32.partialorder %v320, %v450
        %vm454 = vcmp.ge.f32.partialorder %v325, %v450
        %vm455 = vcmp.ge.f32.partialorder %v330, %v450
        %vm456 = vcmp.ge.f32.partialorder %v335, %v450
        %vm457 = vcmp.ge.f32.partialorder %v340, %v450
        %vm458 = vcmp.ge.f32.partialorder %v345, %v450
        %vm459 = vcmp.ge.f32.partialorder %v350, %v450
        %vm460 = vcmp.ge.f32.partialorder %v355, %v450
        %vm461 = vcmp.ge.f32.partialorder %v360, %v450
        %vm462 = vcmp.ge.f32.partialorder %v365, %v450
        %vm463 = vcmp.ge.f32.partialorder %v370, %v450
        %vm464 = vcmp.ge.f32.partialorder %v375, %v450
        %vm465 = vcmp.ge.f32.partialorder %v380, %v450
        %vm466 = vcmp.ge.f32.partialorder %v385, %v450
        %vm467 = vcmp.ge.f32.partialorder %v390, %v450
        %v468 = vld [vmem:[%s5 + $0x1] sm:$0x1]
        %v470 = vperm.slane %v468, 0
        %v472 = vsel %vm452, %v470, 0.0
        %v473 = vsel %vm453, %v470, 0.0
        %v474 = vsel %vm454, %v470, 0.0
        %v475 = vsel %vm455, %v470, 0.0
        %v476 = vsel %vm456, %v470, 0.0
        %v477 = vsel %vm457, %v470, 0.0
        %v478 = vsel %vm458, %v470, 0.0
        %v479 = vsel %vm459, %v470, 0.0
        %v480 = vsel %vm460, %v470, 0.0
        %v481 = vsel %vm461, %v470, 0.0
        %v482 = vsel %vm462, %v470, 0.0
        %v483 = vsel %vm463, %v470, 0.0
        %v484 = vsel %vm464, %v470, 0.0
        %v485 = vsel %vm465, %v470, 0.0
        %v486 = vsel %vm466, %v470, 0.0
        %v487 = vsel %vm467, %v470, 0.0
        %v488 = vadd.f32 %v432, %v472
        %v489 = vadd.f32 %v433, %v473
        %v490 = vadd.f32 %v434, %v474
        %v491 = vadd.f32 %v435, %v475
        %v492 = vadd.f32 %v436, %v476
        %v493 = vadd.f32 %v437, %v477
        %v494 = vadd.f32 %v438, %v478
        %v495 = vadd.f32 %v439, %v479
        %v496 = vadd.f32 %v440, %v480
        %v497 = vadd.f32 %v441, %v481
        %v498 = vadd.f32 %v442, %v482
        %v499 = vadd.f32 %v443, %v483
        %v500 = vadd.f32 %v444, %v484
        %v501 = vadd.f32 %v445, %v485
        %v502 = vadd.f32 %v446, %v486
        %v503 = vadd.f32 %v447, %v487
        %504 = vadd.xlane.f32.xlu0 %v488
        %v505 = vpop.xlane.xlu0 %504
        %506 = vadd.xlane.f32.xlu0 %v489
        %v507 = vpop.xlane.xlu0 %506
        %508 = vadd.xlane.f32.xlu0 %v490
        %v509 = vpop.xlane.xlu0 %508
        %510 = vadd.xlane.f32.xlu0 %v491
        %v511 = vpop.xlane.xlu0 %510
        %512 = vadd.xlane.f32.xlu0 %v492
        %v513 = vpop.xlane.xlu0 %512
        %514 = vadd.xlane.f32.xlu0 %v493
        %v515 = vpop.xlane.xlu0 %514
        %516 = vadd.xlane.f32.xlu0 %v494
        %v517 = vpop.xlane.xlu0 %516
        %518 = vadd.xlane.f32.xlu0 %v495
        %v519 = vpop.xlane.xlu0 %518
        %520 = vadd.xlane.f32.xlu0 %v496
        %v521 = vpop.xlane.xlu0 %520
        %522 = vadd.xlane.f32.xlu0 %v497
        %v523 = vpop.xlane.xlu0 %522
        %524 = vadd.xlane.f32.xlu0 %v498
        %v525 = vpop.xlane.xlu0 %524
        %526 = vadd.xlane.f32.xlu0 %v499
        %v527 = vpop.xlane.xlu0 %526
        %528 = vadd.xlane.f32.xlu0 %v500
        %v529 = vpop.xlane.xlu0 %528
        %530 = vadd.xlane.f32.xlu0 %v501
        %v531 = vpop.xlane.xlu0 %530
        %532 = vadd.xlane.f32.xlu0 %v502
        %v533 = vpop.xlane.xlu0 %532
        %534 = vadd.xlane.f32.xlu0 %v503
        %v535 = vpop.xlane.xlu0 %534
        %s536 = sld [smem:[#allocation2]]
        %v537 = vstv %s536
        %v538 = vadd.f32 %v505, %v537
        %v539 = vadd.f32 %v507, %v537
        %v540 = vadd.f32 %v509, %v537
        %v541 = vadd.f32 %v511, %v537
        %v542 = vadd.f32 %v513, %v537
        %v543 = vadd.f32 %v515, %v537
        %v544 = vadd.f32 %v517, %v537
        %v545 = vadd.f32 %v519, %v537
        %v546 = vadd.f32 %v521, %v537
        %v547 = vadd.f32 %v523, %v537
        %v548 = vadd.f32 %v525, %v537
        %v549 = vadd.f32 %v527, %v537
        %v550 = vadd.f32 %v529, %v537
        %v551 = vadd.f32 %v531, %v537
        %v552 = vadd.f32 %v533, %v537
        %v553 = vadd.f32 %v535, %v537
        %v554 = vlog2.pop %v538
        %v555 = vmul.f32 %v554, 0.6931472
        %v556 = vlog2.pop %v539
        %v557 = vmul.f32 %v556, 0.6931472
        %v558 = vlog2.pop %v540
        %v559 = vmul.f32 %v558, 0.6931472
        %v560 = vlog2.pop %v541
        %v561 = vmul.f32 %v560, 0.6931472
        %v562 = vlog2.pop %v542
        %v563 = vmul.f32 %v562, 0.6931472
        %v564 = vlog2.pop %v543
        %v565 = vmul.f32 %v564, 0.6931472
        %v566 = vlog2.pop %v544
        %v567 = vmul.f32 %v566, 0.6931472
        %v568 = vlog2.pop %v545
        %v569 = vmul.f32 %v568, 0.6931472
        %v570 = vlog2.pop %v546
        %v571 = vmul.f32 %v570, 0.6931472
        %v572 = vlog2.pop %v547
        %v573 = vmul.f32 %v572, 0.6931472
        %v574 = vlog2.pop %v548
        %v575 = vmul.f32 %v574, 0.6931472
        %v576 = vlog2.pop %v549
        %v577 = vmul.f32 %v576, 0.6931472
        %v578 = vlog2.pop %v550
        %v579 = vmul.f32 %v578, 0.6931472
        %v580 = vlog2.pop %v551
        %v581 = vmul.f32 %v580, 0.6931472
        %v582 = vlog2.pop %v552
        %v583 = vmul.f32 %v582, 0.6931472
        %v584 = vlog2.pop %v553
        %v585 = vmul.f32 %v584, 0.6931472
        %v586 = vld [vmem:[%s294] sm:$0xff]
        %v587 = vld [vmem:[%s294 + $0x8] sm:$0xff]
        %v588 = vld [vmem:[%s294 + $0x10] sm:$0xff]
        %v589 = vld [vmem:[%s294 + $0x18] sm:$0xff]
        %v590 = vld [vmem:[%s294 + $0x20] sm:$0xff]
        %v591 = vld [vmem:[%s294 + $0x28] sm:$0xff]
        %v592 = vld [vmem:[%s294 + $0x30] sm:$0xff]
        %v593 = vld [vmem:[%s294 + $0x38] sm:$0xff]
        %v594 = vld [vmem:[%s294 + $0x40] sm:$0xff]
        %v595 = vld [vmem:[%s294 + $0x48] sm:$0xff]
        %v596 = vld [vmem:[%s294 + $0x50] sm:$0xff]
        %v597 = vld [vmem:[%s294 + $0x58] sm:$0xff]
        %v598 = vld [vmem:[%s294 + $0x60] sm:$0xff]
        %v599 = vld [vmem:[%s294 + $0x68] sm:$0xff]
        %v600 = vld [vmem:[%s294 + $0x70] sm:$0xff]
        %v601 = vld [vmem:[%s294 + $0x78] sm:$0xff]
        %v602 = vld [vmem:[%s288] sm:$0xff]
        %v603 = vld [vmem:[%s288 + $0x8] sm:$0xff]
        %v604 = vld [vmem:[%s288 + $0x10] sm:$0xff]
        %v605 = vld [vmem:[%s288 + $0x18] sm:$0xff]
        %v606 = vld [vmem:[%s288 + $0x20] sm:$0xff]
        %v607 = vld [vmem:[%s288 + $0x28] sm:$0xff]
        %v608 = vld [vmem:[%s288 + $0x30] sm:$0xff]
        %v609 = vld [vmem:[%s288 + $0x38] sm:$0xff]
        %v610 = vld [vmem:[%s288 + $0x40] sm:$0xff]
        %v611 = vld [vmem:[%s288 + $0x48] sm:$0xff]
        %v612 = vld [vmem:[%s288 + $0x50] sm:$0xff]
        %v613 = vld [vmem:[%s288 + $0x58] sm:$0xff]
        %v614 = vld [vmem:[%s288 + $0x60] sm:$0xff]
        %v615 = vld [vmem:[%s288 + $0x68] sm:$0xff]
        %v616 = vld [vmem:[%s288 + $0x70] sm:$0xff]
        %v617 = vld [vmem:[%s288 + $0x78] sm:$0xff]
        %v618 = vsub.f32 %v602, %v555
        %v619 = vsub.f32 %v603, %v557
        %v620 = vsub.f32 %v604, %v559
        %v621 = vsub.f32 %v605, %v561
        %v622 = vsub.f32 %v606, %v563
        %v623 = vsub.f32 %v607, %v565
        %v624 = vsub.f32 %v608, %v567
        %v625 = vsub.f32 %v609, %v569
        %v626 = vsub.f32 %v610, %v571
        %v627 = vsub.f32 %v611, %v573
        %v628 = vsub.f32 %v612, %v575
        %v629 = vsub.f32 %v613, %v577
        %v630 = vsub.f32 %v614, %v579
        %v631 = vsub.f32 %v615, %v581
        %v632 = vsub.f32 %v616, %v583
        %v633 = vsub.f32 %v617, %v585
        %v634 = vmul.f32 %v586, %v618
        %v635 = vmul.f32 %v587, %v619
        %v636 = vmul.f32 %v588, %v620
        %v637 = vmul.f32 %v589, %v621
        %v638 = vmul.f32 %v590, %v622
        %v639 = vmul.f32 %v591, %v623
        %v640 = vmul.f32 %v592, %v624
        %v641 = vmul.f32 %v593, %v625
        %v642 = vmul.f32 %v594, %v626
        %v643 = vmul.f32 %v595, %v627
        %v644 = vmul.f32 %v596, %v628
        %v645 = vmul.f32 %v597, %v629
        %v646 = vmul.f32 %v598, %v630
        %v647 = vmul.f32 %v599, %v631
        %v648 = vmul.f32 %v600, %v632
        %v649 = vmul.f32 %v601, %v633
        %vm650 = vcmask 7168
        %v651 = vsel %vm650, %v634, 0.0
        %v652 = vsel %vm650, %v635, 0.0
        %v653 = vadd.f32 %v651, %v652
        %v654 = vsel %vm650, %v636, 0.0
        %v655 = vadd.f32 %v653, %v654
        %v656 = vsel %vm650, %v637, 0.0
        %v657 = vadd.f32 %v655, %v656
        %v658 = vsel %vm650, %v638, 0.0
        %v659 = vadd.f32 %v657, %v658
        %v660 = vsel %vm650, %v639, 0.0
        %v661 = vadd.f32 %v659, %v660
        %v662 = vsel %vm650, %v640, 0.0
        %v663 = vadd.f32 %v661, %v662
        %v664 = vsel %vm650, %v641, 0.0
        %v665 = vadd.f32 %v663, %v664
        %v666 = vsel %vm650, %v642, 0.0
        %v667 = vadd.f32 %v665, %v666
        %v668 = vsel %vm650, %v643, 0.0
        %v669 = vadd.f32 %v667, %v668
        %v670 = vsel %vm650, %v644, 0.0
        %v671 = vadd.f32 %v669, %v670
        %v672 = vsel %vm650, %v645, 0.0
        %v673 = vadd.f32 %v671, %v672
        %v674 = vsel %vm650, %v646, 0.0
        %v675 = vadd.f32 %v673, %v674
        %v676 = vsel %vm650, %v647, 0.0
        %v677 = vadd.f32 %v675, %v676
        %v678 = vsel %vm650, %v648, 0.0
        %v679 = vadd.f32 %v677, %v678
        %v680 = vsel %vm650, %v649, 0.0
        %v681 = vadd.f32 %v679, %v680
        %682 = vadd.xlane.f32.xlu0 %v681
        %v683 = vpop.xlane.xlu0 %682
        %v684 = vrot.slane %v683, 4
        %v685 = vadd.f32 %v683, %v684
        %v686 = vrot.slane %v685, 2
        %v687 = vadd.f32 %v685, %v686
        %v688 = vrot.slane %v687, 1
        %v689 = vadd.f32 %v687, %v688
        %s690 = vtos %v689
        %v691 = vstv %s690
        %692 = vst [vmem:[%s277] sm:$0x1] %v691
        %s693 = sand.u32 %s170, 1
        %s694 = scalar_lea.sflag [#allocation4], %s693
        %s695 = sand.u32 %s170, 1
        %s696 = scalar_lea.vmem [#allocation3], %s695
        // Predicated region
        $region45: #{tpu_custom_call.1} parent=43 // pred_check
          %p697 = pneg %p180
        $region46: #{tpu_custom_call.1} parent=43 // pred_check_branch
          %699 = sbr.rel (%p697) target = $region48
        $region47: #{tpu_custom_call.1} parent=43 // pred_region
          %701 = vsyncadd %s694, 0
          %s702 = scalar_lea.hbm %s6, %s21
          %s704 = sshll.u32 %s696, 4
          %s705 = int_to_ptr.vmem [resolvable:$true] %s704
          %s706 = sshll.u32 %s702, 4
          %s707 = int_to_ptr.hbm [resolvable:$true] %s706
          %709 = dma.vmem_to_hbm [thread:$0]  %s705, 16, %s707, %s694
        $region48: #{tpu_custom_call.1} parent=43 // pred_fallthru
          _
      $region44: #{tpu_custom_call.1} parent=5 // pred_fallthru
        _
      %p710 = scmp.le.s32.totalorder 2, %s16
      // Predicated region
      $region49: #{tpu_custom_call.1} parent=5 // pred_check
        %p711 = pneg %p710
      $region50: #{tpu_custom_call.1} parent=5 // pred_check_branch
        %713 = sbr.rel (%p711) target = $region52
      $region51: #{tpu_custom_call.1} parent=5 // pred_region
        %s714 = ssub.s32 %s16, 2
        // Predicated region
        $region53: #{tpu_custom_call.1} parent=51 // pred_check
          %p715 = pneg %p186
        $region54: #{tpu_custom_call.1} parent=51 // pred_check_branch
          %717 = sbr.rel (%p715) target = $region56
        $region55: #{tpu_custom_call.1} parent=51 // pred_region
          %s718 = sand.u32 %s171, 1
          %s719 = scalar_lea.sflag [#allocation4], %s718
          %s720 = sand.u32 %s171, 1
          %s721 = scalar_lea.vmem [#allocation3], %s720
          %723 = dma.done %s719, 16
        $region56: #{tpu_custom_call.1} parent=51 // pred_fallthru
          _
      $region52: #{tpu_custom_call.1} parent=5 // pred_fallthru
        _
    $region6: #{tpu_custom_call.1} parent=1 // loop_footer
      %s20 = sadd.s32 1, %s16
    $region7: #{tpu_custom_call.1} parent=1 // loop_footer_branch
      %15 = sbr.rel target = $region3
    $region8: #{tpu_custom_call.1} parent=1 // loop_exit
      _
    %724 = vsyncpa [#allocation4], 1
    %s725 = scalar_lea.sflag [#allocation4], 1
    %726 = vsyncpa %s725, 1

</llo_original>
